<compile_context>
chip_gen: v7x
topology: tpu7x:2x2x1
jax: 0.10.0
libtpu: 0.0.40
codegen_flags: <defaults>
</compile_context>

<pallas_src>
import jax
import jax.numpy as jnp
from jax.experimental import pallas as pl
from jax.experimental.pallas import tpu as pltpu

B_TILE = 128  # batch rows per kernel invocation (batch lives on the lane axis)


def lcbow_kernel(tok_ref, ew_ref, b_ref, out_ref):
    # tok_ref: (T, B_TILE) int32   -- tokens, batch on lanes
    # ew_ref : (V_pad, 1)  float32 -- folded embedding*weight vector (Ew = E @ w)
    # b_ref  : (1, 1)      float32 -- linear bias (SMEM scalar)
    # out_ref: (1, 1, B_TILE) float32 -- sigmoid(logits), lane-dense
    T, Bt = tok_ref.shape
    Vp, _ = ew_ref.shape

    tok = tok_ref[...]                                            # (T, Bt) int32
    vocab_ids = jax.lax.broadcasted_iota(jnp.int32, (Vp, Bt), 0)  # vocab on sublanes

    # Per-example token histogram over the (padded) vocab, accumulated over T.
    # T is small and static -> trace-time unroll; no (T, V, B) intermediate ever exists.
    counts = jnp.zeros((Vp, Bt), jnp.float32)
    for t in range(T):
        counts = counts + (vocab_ids == tok[t : t + 1, :]).astype(jnp.float32)

    # mean_t Ew[tok[t, b]]  ==  sum_v counts[v, b] * Ew[v] / T   (Linear already folded)
    ew = ew_ref[...]                                              # (Vp, 1), lane-broadcast
    logits = jnp.sum(counts * ew, axis=0, keepdims=True) * (1.0 / T) + b_ref[0, 0]  # (1, Bt)

    out_ref[...] = jax.nn.sigmoid(logits).reshape(1, 1, Bt)


def lcbow_forward(tokens, emb, w, b):
    """tokens: (B, T) int32; emb: (V, D) f32; w: (1, D) f32; b: (1, 1) f32 -> (B,) f32."""
    B, T = tokens.shape
    V, D = emb.shape

    # One-time weight fold (cheap wrapper prologue): Ew[v] = emb[v, :] @ w[0, :].
    ew = jnp.dot(emb.astype(jnp.float32), w.reshape(D).astype(jnp.float32))   # (V,)

    # Pad vocab to lane width and batch to the tile height; transpose tokens so the
    # batch axis sits on lanes (lane-dense output, layout plumbing only).
    v_pad = pl.cdiv(V, 128) * 128
    b_pad = pl.cdiv(B, B_TILE) * B_TILE
    nb = b_pad // B_TILE

    ew2d = jnp.pad(ew, (0, v_pad - V)).reshape(v_pad, 1)
    tok_t = jnp.pad(tokens.astype(jnp.int32).T, ((0, 0), (0, b_pad - B)))     # (T, b_pad)
    bias = jnp.asarray(b, jnp.float32).reshape(1, 1)

    out = pl.pallas_call(
        lcbow_kernel,
        out_shape=jax.ShapeDtypeStruct((nb, 1, B_TILE), jnp.float32),
        grid=(nb,),
        in_specs=[
            pl.BlockSpec((T, B_TILE), lambda i: (0, i)),                 # tokens tile
            pl.BlockSpec((v_pad, 1), lambda i: (0, 0)),                  # folded Ew (resident)
            pl.BlockSpec(memory_space=pltpu.MemorySpace.SMEM),           # bias scalar
        ],
        out_specs=pl.BlockSpec((1, 1, B_TILE), lambda i: (i, 0, 0)),
        compiler_params=pltpu.CompilerParams(
            dimension_semantics=("parallel",),   # v7x: split batch tiles across both TCs
        ),
    )(tok_t, ew2d, bias)

    return out.reshape(b_pad)[:B]   # drop batch padding; matches torch .squeeze(1)


if __name__ == "__main__":
    V, D = 64, 128          # small vocab, embedding_dim=128 as in the module
    B, T = 8, 8             # batch of 8 padded sequences of length 8

    key = jax.random.PRNGKey(0)
    k_emb, k_w, k_b, k_tok = jax.random.split(key, 4)

    # Embedding table: uniform(-0.5, 0.5), matching LCBOW.init_weights().
    emb = jax.random.uniform(k_emb, (V, D), jnp.float32, minval=-0.5, maxval=0.5)
    # NOTE: the module zero-inits the linear layer (output would be the constant 0.5);
    # use small random values so the linear+sigmoid path is actually exercised.
    w = jax.random.normal(k_w, (1, D), jnp.float32) * 0.1
    b = jax.random.normal(k_b, (1, 1), jnp.float32) * 0.1
    tokens = jax.random.randint(k_tok, (B, T), 0, V, dtype=jnp.int32)

    out = jax.block_until_ready(lcbow_forward(tokens, emb, w, b))

    # Pure-JAX reference of the PyTorch forward (gather -> mean -> linear -> sigmoid).
    ref = jax.nn.sigmoid(jnp.mean(emb[tokens].astype(jnp.float32), axis=1) @ w[0] + b[0, 0])

    assert out.shape == (B,), out.shape
    assert jnp.allclose(out, ref, atol=1e-5, rtol=1e-5), (out, ref)
    print("KERNEL_OK")
</pallas_src>

<mosaic_0001>
module attributes {stable_mosaic.version = 11 : i64} {
  func.func @lcbow_kernel(%arg0: i32, %arg1: memref<8x128xi32, #tpu.memory_space<vmem>>, %arg2: memref<128x1xf32, #tpu.memory_space<vmem>>, %arg3: memref<1x1xf32, #tpu.memory_space<smem>>, %arg4: memref<1x1x128xf32, #tpu.memory_space<vmem>>) attributes {dimension_semantics = [#tpu.dimension_semantics<parallel>], iteration_bounds = array<i64: 1>, scalar_prefetch = 0 : i64, scratch_operands = 0 : i64, tpu.core_type = #tpu.core_type<tc>, window_params = [{transform_indices = @transform_0, window_bounds = array<i64: 8, 128>}, {pipeline_mode = #tpu.pipeline_mode<synchronous>, transform_indices = @transform_1, window_bounds = array<i64: 128, 1>}, {transform_indices = @transform_2, window_bounds = array<i64: 1, 1>}, {transform_indices = @transform_3, window_bounds = array<i64: 1, 1, 128>}]} {
    %c0 = arith.constant 0 : index
    %c0_0 = arith.constant 0 : index
    %0 = vector.load %arg1[%c0, %c0_0] : memref<8x128xi32, #tpu.memory_space<vmem>>, vector<8x128xi32>
    %1 = tpu.iota {dimensions = array<i32: 0>} : vector<128x128xi32>
    %cst = arith.constant 0.000000e+00 : f32
    %2 = vector.broadcast %cst : f32 to vector<128x128xf32>
    %3 = vector.extract_strided_slice %0 {offsets = [0, 0], sizes = [1, 128], strides = [1, 1]} : vector<8x128xi32> to vector<1x128xi32>
    %4 = vector.broadcast %3 : vector<1x128xi32> to vector<128x128xi32>
    %5 = arith.cmpi eq, %1, %4 : vector<128x128xi32>
    %6 = arith.extui %5 : vector<128x128xi1> to vector<128x128xi32>
    %7 = arith.sitofp %6 : vector<128x128xi32> to vector<128x128xf32>
    %8 = arith.addf %2, %7 : vector<128x128xf32>
    %9 = vector.extract_strided_slice %0 {offsets = [1, 0], sizes = [1, 128], strides = [1, 1]} : vector<8x128xi32> to vector<1x128xi32>
    %10 = vector.broadcast %9 : vector<1x128xi32> to vector<128x128xi32>
    %11 = arith.cmpi eq, %1, %10 : vector<128x128xi32>
    %12 = arith.extui %11 : vector<128x128xi1> to vector<128x128xi32>
    %13 = arith.sitofp %12 : vector<128x128xi32> to vector<128x128xf32>
    %14 = arith.addf %8, %13 : vector<128x128xf32>
    %15 = vector.extract_strided_slice %0 {offsets = [2, 0], sizes = [1, 128], strides = [1, 1]} : vector<8x128xi32> to vector<1x128xi32>
    %16 = vector.broadcast %15 : vector<1x128xi32> to vector<128x128xi32>
    %17 = arith.cmpi eq, %1, %16 : vector<128x128xi32>
    %18 = arith.extui %17 : vector<128x128xi1> to vector<128x128xi32>
    %19 = arith.sitofp %18 : vector<128x128xi32> to vector<128x128xf32>
    %20 = arith.addf %14, %19 : vector<128x128xf32>
    %21 = vector.extract_strided_slice %0 {offsets = [3, 0], sizes = [1, 128], strides = [1, 1]} : vector<8x128xi32> to vector<1x128xi32>
    %22 = vector.broadcast %21 : vector<1x128xi32> to vector<128x128xi32>
    %23 = arith.cmpi eq, %1, %22 : vector<128x128xi32>
    %24 = arith.extui %23 : vector<128x128xi1> to vector<128x128xi32>
    %25 = arith.sitofp %24 : vector<128x128xi32> to vector<128x128xf32>
    %26 = arith.addf %20, %25 : vector<128x128xf32>
    %27 = vector.extract_strided_slice %0 {offsets = [4, 0], sizes = [1, 128], strides = [1, 1]} : vector<8x128xi32> to vector<1x128xi32>
    %28 = vector.broadcast %27 : vector<1x128xi32> to vector<128x128xi32>
    %29 = arith.cmpi eq, %1, %28 : vector<128x128xi32>
    %30 = arith.extui %29 : vector<128x128xi1> to vector<128x128xi32>
    %31 = arith.sitofp %30 : vector<128x128xi32> to vector<128x128xf32>
    %32 = arith.addf %26, %31 : vector<128x128xf32>
    %33 = vector.extract_strided_slice %0 {offsets = [5, 0], sizes = [1, 128], strides = [1, 1]} : vector<8x128xi32> to vector<1x128xi32>
    %34 = vector.broadcast %33 : vector<1x128xi32> to vector<128x128xi32>
    %35 = arith.cmpi eq, %1, %34 : vector<128x128xi32>
    %36 = arith.extui %35 : vector<128x128xi1> to vector<128x128xi32>
    %37 = arith.sitofp %36 : vector<128x128xi32> to vector<128x128xf32>
    %38 = arith.addf %32, %37 : vector<128x128xf32>
    %39 = vector.extract_strided_slice %0 {offsets = [6, 0], sizes = [1, 128], strides = [1, 1]} : vector<8x128xi32> to vector<1x128xi32>
    %40 = vector.broadcast %39 : vector<1x128xi32> to vector<128x128xi32>
    %41 = arith.cmpi eq, %1, %40 : vector<128x128xi32>
    %42 = arith.extui %41 : vector<128x128xi1> to vector<128x128xi32>
    %43 = arith.sitofp %42 : vector<128x128xi32> to vector<128x128xf32>
    %44 = arith.addf %38, %43 : vector<128x128xf32>
    %45 = vector.extract_strided_slice %0 {offsets = [7, 0], sizes = [1, 128], strides = [1, 1]} : vector<8x128xi32> to vector<1x128xi32>
    %46 = vector.broadcast %45 : vector<1x128xi32> to vector<128x128xi32>
    %47 = arith.cmpi eq, %1, %46 : vector<128x128xi32>
    %48 = arith.extui %47 : vector<128x128xi1> to vector<128x128xi32>
    %49 = arith.sitofp %48 : vector<128x128xi32> to vector<128x128xf32>
    %50 = arith.addf %44, %49 : vector<128x128xf32>
    %c0_1 = arith.constant 0 : index
    %c0_2 = arith.constant 0 : index
    %51 = vector.load %arg2[%c0_1, %c0_2] : memref<128x1xf32, #tpu.memory_space<vmem>>, vector<128x1xf32>
    %52 = vector.broadcast %51 : vector<128x1xf32> to vector<128x128xf32>
    %53 = arith.mulf %50, %52 : vector<128x128xf32>
    %cst_3 = arith.constant dense<0.000000e+00> : vector<128xf32>
    %54 = vector.multi_reduction <add>, %53, %cst_3 [0] : vector<128x128xf32> to vector<128xf32>
    %55 = vector.shape_cast %54 : vector<128xf32> to vector<1x128xf32>
    %cst_4 = arith.constant 1.250000e-01 : f32
    %56 = vector.broadcast %cst_4 : f32 to vector<1x128xf32>
    %57 = arith.mulf %55, %56 : vector<1x128xf32>
    %c0_5 = arith.constant 0 : index
    %c0_6 = arith.constant 0 : index
    %58 = memref.load %arg3[%c0_5, %c0_6] : memref<1x1xf32, #tpu.memory_space<smem>>
    %59 = vector.broadcast %58 : f32 to vector<1x128xf32>
    %60 = arith.addf %57, %59 : vector<1x128xf32>
    %61 = arith.negf %60 : vector<1x128xf32>
    %62 = math.exp %61 : vector<1x128xf32>
    %cst_7 = arith.constant 1.000000e+00 : f32
    %63 = vector.broadcast %cst_7 : f32 to vector<1x128xf32>
    %64 = arith.addf %63, %62 : vector<1x128xf32>
    %65 = arith.divf %63, %64 : vector<1x128xf32>
    %66 = vector.shape_cast %65 : vector<1x128xf32> to vector<1x1x128xf32>
    %c0_8 = arith.constant 0 : index
    %c0_9 = arith.constant 0 : index
    %c0_10 = arith.constant 0 : index
    %67 = vector.load %arg4[%c0_8, %c0_9, %c0_10] : memref<1x1x128xf32, #tpu.memory_space<vmem>>, vector<1x1x128xf32>
    tpu.vector_store %arg4[%c0_8, %c0_9, %c0_10], %66 {strides = array<i32>} : memref<1x1x128xf32, #tpu.memory_space<vmem>>, vector<1x1x128xf32>,
    return
  }
  func.func @transform_0(%arg0: i32) -> (i32, i32) {
    %c0_i32 = arith.constant 0 : i32
    %c0_i32_0 = arith.constant 0 : i32
    return %c0_i32, %arg0 : i32, i32
  }
  func.func @transform_1(%arg0: i32) -> (i32, i32) {
    %c0_i32 = arith.constant 0 : i32
    %c0_i32_0 = arith.constant 0 : i32
    %c0_i32_1 = arith.constant 0 : i32
    return %c0_i32, %c0_i32_0 : i32, i32
  }
  func.func @transform_2(%arg0: i32) -> (i32, i32) {
    %c0_i32 = arith.constant 0 : i32
    %c0_i32_0 = arith.constant 0 : i32
    %c0_i32_1 = arith.constant 0 : i32
    return %c0_i32, %c0_i32_0 : i32, i32
  }
  func.func @transform_3(%arg0: i32) -> (i32, i32, i32) {
    %c0_i32 = arith.constant 0 : i32
    %c0_i32_0 = arith.constant 0 : i32
    %c0_i32_1 = arith.constant 0 : i32
    return %arg0, %c0_i32, %c0_i32_0 : i32, i32, i32
  }
}

</mosaic_0001>

<llo_original>
// kernel: tpu_custom_call.1
$region0: #{tpu_custom_call.1}
  #allocation0 [shape = 'u32[]', space=smem, size = 0x4, offset = 0x4, fixed_abs, tag = 'smem constant byte address 0x4 - core index']
  #allocation1 [shape = 'u32[144,128]{1,0:T(1,128)}', space=vmem, size = 0x12000, scoped, tag = 'internal scratch']
  #allocation2 [shape = 'f32[1,1]{1,0:T(1,128)S(6)}', space=smem, size = 0x200, scoped, tag = 'scoped memory for tpu_custom_call.1']
  %s0 = inlined_call_operand.vmem [shape: s32[8,128], index: 0, kind: input, shape index: {}]
  %s1 = inlined_call_operand.vmem [shape: f32[128,1], index: 1, kind: input, shape index: {}]
  %s2 = inlined_call_operand.<no memory space> [shape: f32[1,1], index: 2, kind: input, shape index: {}]
  %s3 = inlined_call_operand.hbm [shape: f32[1,1,128], index: 3, kind: output, shape index: {}]
  %s4 = sld [smem:[#allocation0]]
  $region22: #{tpu_custom_call.1} parent=0
    _
  %s6 = ssub.s32 1, %s4
  %s7 = scalar_select 0, %s6, %s4
  %8 = sst [smem:[#allocation2]] %s2
  $region1: #{tpu_custom_call.1} parent=0
    #allocation3 [shape = 'u8[512]{0}', space=vmem, size = 0x400, scoped, tag = 'output window, operand 0, single buffered']
    #allocation4 [shape = 's32[1]{0}', space=sflag, size = 0x4, scoped, tag = 'scoped memory for tpu_custom_call.1']
    %9 = vsyncpa [#allocation4], 0
    // Predicated region
    $region2: #{tpu_custom_call.1} parent=1 // pred_check
      _
    $region3: #{tpu_custom_call.1} parent=1 // pred_check_branch
      %11 = sbr.rel (0) target = $region5
    $region4: #{tpu_custom_call.1} parent=1 // pred_region
      _
    $region5: #{tpu_custom_call.1} parent=1 // pred_fallthru
      _
    // Predicated region
    $region6: #{tpu_custom_call.1} parent=1 // pred_check
      _
    $region7: #{tpu_custom_call.1} parent=1 // pred_check_branch
      %13 = sbr.rel (0) target = $region9
    $region8: #{tpu_custom_call.1} parent=1 // pred_region
      _
    $region9: #{tpu_custom_call.1} parent=1 // pred_fallthru
      _
    // Predicated region
    $region10: #{tpu_custom_call.1} parent=1 // pred_check
      _
    $region11: #{tpu_custom_call.1} parent=1 // pred_check_branch
      %15 = sbr.rel (0) target = $region13
    $region12: #{tpu_custom_call.1} parent=1 // pred_region
      _
    $region13: #{tpu_custom_call.1} parent=1 // pred_fallthru
      _
    %v16 = vld [vmem:[%s0] sm:$0xff]
    %v17 = vlaneseq
    %v18 = vshrl.u32 %v17, 7
    %v19 = vadd.s32 %v18, 8
    %v20 = vadd.s32 %v18, 16
    %v21 = vadd.s32 %v18, 24
    %v22 = vadd.s32 %v18, 32
    %v23 = vadd.s32 %v18, 40
    %v24 = vadd.s32 %v18, 48
    %v25 = vadd.s32 %v18, 56
    %v26 = vadd.s32 %v18, 64
    %v27 = vadd.s32 %v18, 72
    %v28 = vadd.s32 %v18, 80
    %v29 = vadd.s32 %v18, 88
    %v30 = vadd.s32 %v18, 96
    %v31 = vadd.s32 %v18, 104
    %v32 = vadd.s32 %v18, 112
    %v33 = vadd.s32 %v18, 120
    %v34 = vlaneseq
    %v35 = vshrl.u32 %v34, 7
    %v36 = vsub.s32 0, %v35
    %v37 = vrot.slane %v16, %v36
    %vm38 = vcmp.eq.s32.totalorder %v18, %v37
    %vm39 = vcmp.eq.s32.totalorder %v19, %v37
    %vm40 = vcmp.eq.s32.totalorder %v20, %v37
    %vm41 = vcmp.eq.s32.totalorder %v21, %v37
    %vm42 = vcmp.eq.s32.totalorder %v22, %v37
    %vm43 = vcmp.eq.s32.totalorder %v23, %v37
    %vm44 = vcmp.eq.s32.totalorder %v24, %v37
    %vm45 = vcmp.eq.s32.totalorder %v25, %v37
    %vm46 = vcmp.eq.s32.totalorder %v26, %v37
    %vm47 = vcmp.eq.s32.totalorder %v27, %v37
    %vm48 = vcmp.eq.s32.totalorder %v28, %v37
    %vm49 = vcmp.eq.s32.totalorder %v29, %v37
    %vm50 = vcmp.eq.s32.totalorder %v30, %v37
    %vm51 = vcmp.eq.s32.totalorder %v31, %v37
    %vm52 = vcmp.eq.s32.totalorder %v32, %v37
    %vm53 = vcmp.eq.s32.totalorder %v33, %v37
    %v54 = vsel %vm38, 1, 0
    %v55 = vsel %vm39, 1, 0
    %v56 = vsel %vm40, 1, 0
    %v57 = vsel %vm41, 1, 0
    %v58 = vsel %vm42, 1, 0
    %v59 = vsel %vm43, 1, 0
    %v60 = vsel %vm44, 1, 0
    %v61 = vsel %vm45, 1, 0
    %v62 = vsel %vm46, 1, 0
    %v63 = vsel %vm47, 1, 0
    %v64 = vsel %vm48, 1, 0
    %v65 = vsel %vm49, 1, 0
    %v66 = vsel %vm50, 1, 0
    %v67 = vsel %vm51, 1, 0
    %v68 = vsel %vm52, 1, 0
    %v69 = vsel %vm53, 1, 0
    %v70 = vcvt.s32.f32 %v54
    %v71 = vcvt.s32.f32 %v55
    %v72 = vcvt.s32.f32 %v56
    %v73 = vcvt.s32.f32 %v57
    %v74 = vcvt.s32.f32 %v58
    %v75 = vcvt.s32.f32 %v59
    %v76 = vcvt.s32.f32 %v60
    %v77 = vcvt.s32.f32 %v61
    %v78 = vcvt.s32.f32 %v62
    %v79 = vcvt.s32.f32 %v63
    %v80 = vcvt.s32.f32 %v64
    %v81 = vcvt.s32.f32 %v65
    %v82 = vcvt.s32.f32 %v66
    %v83 = vcvt.s32.f32 %v67
    %v84 = vcvt.s32.f32 %v68
    %v85 = vcvt.s32.f32 %v69
    %v86 = vadd.f32 %v70, 0.0
    %v87 = vadd.f32 %v71, 0.0
    %v88 = vadd.f32 %v72, 0.0
    %v89 = vadd.f32 %v73, 0.0
    %v90 = vadd.f32 %v74, 0.0
    %v91 = vadd.f32 %v75, 0.0
    %v92 = vadd.f32 %v76, 0.0
    %v93 = vadd.f32 %v77, 0.0
    %v94 = vadd.f32 %v78, 0.0
    %v95 = vadd.f32 %v79, 0.0
    %v96 = vadd.f32 %v80, 0.0
    %v97 = vadd.f32 %v81, 0.0
    %v98 = vadd.f32 %v82, 0.0
    %v99 = vadd.f32 %v83, 0.0
    %v100 = vadd.f32 %v84, 0.0
    %v101 = vadd.f32 %v85, 0.0
    %v102 = vlaneseq
    %v103 = vshrl.u32 %v102, 7
    %v104 = vsub.s32 1, %v103
    %v105 = vrot.slane %v16, %v104
    %vm106 = vcmp.eq.s32.totalorder %v18, %v105
    %vm107 = vcmp.eq.s32.totalorder %v19, %v105
    %vm108 = vcmp.eq.s32.totalorder %v20, %v105
    %vm109 = vcmp.eq.s32.totalorder %v21, %v105
    %vm110 = vcmp.eq.s32.totalorder %v22, %v105
    %vm111 = vcmp.eq.s32.totalorder %v23, %v105
    %vm112 = vcmp.eq.s32.totalorder %v24, %v105
    %vm113 = vcmp.eq.s32.totalorder %v25, %v105
    %vm114 = vcmp.eq.s32.totalorder %v26, %v105
    %vm115 = vcmp.eq.s32.totalorder %v27, %v105
    %vm116 = vcmp.eq.s32.totalorder %v28, %v105
    %vm117 = vcmp.eq.s32.totalorder %v29, %v105
    %vm118 = vcmp.eq.s32.totalorder %v30, %v105
    %vm119 = vcmp.eq.s32.totalorder %v31, %v105
    %vm120 = vcmp.eq.s32.totalorder %v32, %v105
    %vm121 = vcmp.eq.s32.totalorder %v33, %v105
    %v122 = vsel %vm106, 1, 0
    %v123 = vsel %vm107, 1, 0
    %v124 = vsel %vm108, 1, 0
    %v125 = vsel %vm109, 1, 0
    %v126 = vsel %vm110, 1, 0
    %v127 = vsel %vm111, 1, 0
    %v128 = vsel %vm112, 1, 0
    %v129 = vsel %vm113, 1, 0
    %v130 = vsel %vm114, 1, 0
    %v131 = vsel %vm115, 1, 0
    %v132 = vsel %vm116, 1, 0
    %v133 = vsel %vm117, 1, 0
    %v134 = vsel %vm118, 1, 0
    %v135 = vsel %vm119, 1, 0
    %v136 = vsel %vm120, 1, 0
    %v137 = vsel %vm121, 1, 0
    %v138 = vcvt.s32.f32 %v122
    %v139 = vcvt.s32.f32 %v123
    %v140 = vcvt.s32.f32 %v124
    %v141 = vcvt.s32.f32 %v125
    %v142 = vcvt.s32.f32 %v126
    %v143 = vcvt.s32.f32 %v127
    %v144 = vcvt.s32.f32 %v128
    %v145 = vcvt.s32.f32 %v129
    %v146 = vcvt.s32.f32 %v130
    %v147 = vcvt.s32.f32 %v131
    %v148 = vcvt.s32.f32 %v132
    %v149 = vcvt.s32.f32 %v133
    %v150 = vcvt.s32.f32 %v134
    %v151 = vcvt.s32.f32 %v135
    %v152 = vcvt.s32.f32 %v136
    %v153 = vcvt.s32.f32 %v137
    %v154 = vadd.f32 %v86, %v138
    %v155 = vadd.f32 %v87, %v139
    %v156 = vadd.f32 %v88, %v140
    %v157 = vadd.f32 %v89, %v141
    %v158 = vadd.f32 %v90, %v142
    %v159 = vadd.f32 %v91, %v143
    %v160 = vadd.f32 %v92, %v144
    %v161 = vadd.f32 %v93, %v145
    %v162 = vadd.f32 %v94, %v146
    %v163 = vadd.f32 %v95, %v147
    %v164 = vadd.f32 %v96, %v148
    %v165 = vadd.f32 %v97, %v149
    %v166 = vadd.f32 %v98, %v150
    %v167 = vadd.f32 %v99, %v151
    %v168 = vadd.f32 %v100, %v152
    %v169 = vadd.f32 %v101, %v153
    %v170 = vlaneseq
    %v171 = vshrl.u32 %v170, 7
    %v172 = vsub.s32 2, %v171
    %v173 = vrot.slane %v16, %v172
    %vm174 = vcmp.eq.s32.totalorder %v18, %v173
    %vm175 = vcmp.eq.s32.totalorder %v19, %v173
    %vm176 = vcmp.eq.s32.totalorder %v20, %v173
    %vm177 = vcmp.eq.s32.totalorder %v21, %v173
    %vm178 = vcmp.eq.s32.totalorder %v22, %v173
    %vm179 = vcmp.eq.s32.totalorder %v23, %v173
    %vm180 = vcmp.eq.s32.totalorder %v24, %v173
    %vm181 = vcmp.eq.s32.totalorder %v25, %v173
    %vm182 = vcmp.eq.s32.totalorder %v26, %v173
    %vm183 = vcmp.eq.s32.totalorder %v27, %v173
    %vm184 = vcmp.eq.s32.totalorder %v28, %v173
    %vm185 = vcmp.eq.s32.totalorder %v29, %v173
    %vm186 = vcmp.eq.s32.totalorder %v30, %v173
    %vm187 = vcmp.eq.s32.totalorder %v31, %v173
    %vm188 = vcmp.eq.s32.totalorder %v32, %v173
    %vm189 = vcmp.eq.s32.totalorder %v33, %v173
    %v190 = vsel %vm174, 1, 0
    %v191 = vsel %vm175, 1, 0
    %v192 = vsel %vm176, 1, 0
    %v193 = vsel %vm177, 1, 0
    %v194 = vsel %vm178, 1, 0
    %v195 = vsel %vm179, 1, 0
    %v196 = vsel %vm180, 1, 0
    %v197 = vsel %vm181, 1, 0
    %v198 = vsel %vm182, 1, 0
    %v199 = vsel %vm183, 1, 0
    %v200 = vsel %vm184, 1, 0
    %v201 = vsel %vm185, 1, 0
    %v202 = vsel %vm186, 1, 0
    %v203 = vsel %vm187, 1, 0
    %v204 = vsel %vm188, 1, 0
    %v205 = vsel %vm189, 1, 0
    %v206 = vcvt.s32.f32 %v190
    %v207 = vcvt.s32.f32 %v191
    %v208 = vcvt.s32.f32 %v192
    %v209 = vcvt.s32.f32 %v193
    %v210 = vcvt.s32.f32 %v194
    %v211 = vcvt.s32.f32 %v195
    %v212 = vcvt.s32.f32 %v196
    %v213 = vcvt.s32.f32 %v197
    %v214 = vcvt.s32.f32 %v198
    %v215 = vcvt.s32.f32 %v199
    %v216 = vcvt.s32.f32 %v200
    %v217 = vcvt.s32.f32 %v201
    %v218 = vcvt.s32.f32 %v202
    %v219 = vcvt.s32.f32 %v203
    %v220 = vcvt.s32.f32 %v204
    %v221 = vcvt.s32.f32 %v205
    %v222 = vadd.f32 %v154, %v206
    %v223 = vadd.f32 %v155, %v207
    %v224 = vadd.f32 %v156, %v208
    %v225 = vadd.f32 %v157, %v209
    %v226 = vadd.f32 %v158, %v210
    %v227 = vadd.f32 %v159, %v211
    %v228 = vadd.f32 %v160, %v212
    %v229 = vadd.f32 %v161, %v213
    %v230 = vadd.f32 %v162, %v214
    %v231 = vadd.f32 %v163, %v215
    %v232 = vadd.f32 %v164, %v216
    %v233 = vadd.f32 %v165, %v217
    %v234 = vadd.f32 %v166, %v218
    %v235 = vadd.f32 %v167, %v219
    %v236 = vadd.f32 %v168, %v220
    %v237 = vadd.f32 %v169, %v221
    %v238 = vlaneseq
    %v239 = vshrl.u32 %v238, 7
    %v240 = vsub.s32 3, %v239
    %v241 = vrot.slane %v16, %v240
    %vm242 = vcmp.eq.s32.totalorder %v18, %v241
    %vm243 = vcmp.eq.s32.totalorder %v19, %v241
    %vm244 = vcmp.eq.s32.totalorder %v20, %v241
    %vm245 = vcmp.eq.s32.totalorder %v21, %v241
    %vm246 = vcmp.eq.s32.totalorder %v22, %v241
    %vm247 = vcmp.eq.s32.totalorder %v23, %v241
    %vm248 = vcmp.eq.s32.totalorder %v24, %v241
    %vm249 = vcmp.eq.s32.totalorder %v25, %v241
    %vm250 = vcmp.eq.s32.totalorder %v26, %v241
    %vm251 = vcmp.eq.s32.totalorder %v27, %v241
    %vm252 = vcmp.eq.s32.totalorder %v28, %v241
    %vm253 = vcmp.eq.s32.totalorder %v29, %v241
    %vm254 = vcmp.eq.s32.totalorder %v30, %v241
    %vm255 = vcmp.eq.s32.totalorder %v31, %v241
    %vm256 = vcmp.eq.s32.totalorder %v32, %v241
    %vm257 = vcmp.eq.s32.totalorder %v33, %v241
    %v258 = vsel %vm242, 1, 0
    %v259 = vsel %vm243, 1, 0
    %v260 = vsel %vm244, 1, 0
    %v261 = vsel %vm245, 1, 0
    %v262 = vsel %vm246, 1, 0
    %v263 = vsel %vm247, 1, 0
    %v264 = vsel %vm248, 1, 0
    %v265 = vsel %vm249, 1, 0
    %v266 = vsel %vm250, 1, 0
    %v267 = vsel %vm251, 1, 0
    %v268 = vsel %vm252, 1, 0
    %v269 = vsel %vm253, 1, 0
    %v270 = vsel %vm254, 1, 0
    %v271 = vsel %vm255, 1, 0
    %v272 = vsel %vm256, 1, 0
    %v273 = vsel %vm257, 1, 0
    %v274 = vcvt.s32.f32 %v258
    %v275 = vcvt.s32.f32 %v259
    %v276 = vcvt.s32.f32 %v260
    %v277 = vcvt.s32.f32 %v261
    %v278 = vcvt.s32.f32 %v262
    %v279 = vcvt.s32.f32 %v263
    %v280 = vcvt.s32.f32 %v264
    %v281 = vcvt.s32.f32 %v265
    %v282 = vcvt.s32.f32 %v266
    %v283 = vcvt.s32.f32 %v267
    %v284 = vcvt.s32.f32 %v268
    %v285 = vcvt.s32.f32 %v269
    %v286 = vcvt.s32.f32 %v270
    %v287 = vcvt.s32.f32 %v271
    %v288 = vcvt.s32.f32 %v272
    %v289 = vcvt.s32.f32 %v273
    %v290 = vadd.f32 %v222, %v274
    %v291 = vadd.f32 %v223, %v275
    %v292 = vadd.f32 %v224, %v276
    %v293 = vadd.f32 %v225, %v277
    %v294 = vadd.f32 %v226, %v278
    %v295 = vadd.f32 %v227, %v279
    %v296 = vadd.f32 %v228, %v280
    %v297 = vadd.f32 %v229, %v281
    %v298 = vadd.f32 %v230, %v282
    %v299 = vadd.f32 %v231, %v283
    %v300 = vadd.f32 %v232, %v284
    %v301 = vadd.f32 %v233, %v285
    %v302 = vadd.f32 %v234, %v286
    %v303 = vadd.f32 %v235, %v287
    %v304 = vadd.f32 %v236, %v288
    %v305 = vadd.f32 %v237, %v289
    %v306 = vlaneseq
    %v307 = vshrl.u32 %v306, 7
    %v308 = vsub.s32 4, %v307
    %v309 = vrot.slane %v16, %v308
    %vm310 = vcmp.eq.s32.totalorder %v18, %v309
    %vm311 = vcmp.eq.s32.totalorder %v19, %v309
    %vm312 = vcmp.eq.s32.totalorder %v20, %v309
    %vm313 = vcmp.eq.s32.totalorder %v21, %v309
    %vm314 = vcmp.eq.s32.totalorder %v22, %v309
    %vm315 = vcmp.eq.s32.totalorder %v23, %v309
    %vm316 = vcmp.eq.s32.totalorder %v24, %v309
    %vm317 = vcmp.eq.s32.totalorder %v25, %v309
    %vm318 = vcmp.eq.s32.totalorder %v26, %v309
    %vm319 = vcmp.eq.s32.totalorder %v27, %v309
    %vm320 = vcmp.eq.s32.totalorder %v28, %v309
    %vm321 = vcmp.eq.s32.totalorder %v29, %v309
    %vm322 = vcmp.eq.s32.totalorder %v30, %v309
    %vm323 = vcmp.eq.s32.totalorder %v31, %v309
    %vm324 = vcmp.eq.s32.totalorder %v32, %v309
    %vm325 = vcmp.eq.s32.totalorder %v33, %v309
    %v326 = vsel %vm310, 1, 0
    %v327 = vsel %vm311, 1, 0
    %v328 = vsel %vm312, 1, 0
    %v329 = vsel %vm313, 1, 0
    %v330 = vsel %vm314, 1, 0
    %v331 = vsel %vm315, 1, 0
    %v332 = vsel %vm316, 1, 0
    %v333 = vsel %vm317, 1, 0
    %v334 = vsel %vm318, 1, 0
    %v335 = vsel %vm319, 1, 0
    %v336 = vsel %vm320, 1, 0
    %v337 = vsel %vm321, 1, 0
    %v338 = vsel %vm322, 1, 0
    %v339 = vsel %vm323, 1, 0
    %v340 = vsel %vm324, 1, 0
    %v341 = vsel %vm325, 1, 0
    %v342 = vcvt.s32.f32 %v326
    %v343 = vcvt.s32.f32 %v327
    %v344 = vcvt.s32.f32 %v328
    %v345 = vcvt.s32.f32 %v329
    %v346 = vcvt.s32.f32 %v330
    %v347 = vcvt.s32.f32 %v331
    %v348 = vcvt.s32.f32 %v332
    %v349 = vcvt.s32.f32 %v333
    %v350 = vcvt.s32.f32 %v334
    %v351 = vcvt.s32.f32 %v335
    %v352 = vcvt.s32.f32 %v336
    %v353 = vcvt.s32.f32 %v337
    %v354 = vcvt.s32.f32 %v338
    %v355 = vcvt.s32.f32 %v339
    %v356 = vcvt.s32.f32 %v340
    %v357 = vcvt.s32.f32 %v341
    %v358 = vadd.f32 %v290, %v342
    %v359 = vadd.f32 %v291, %v343
    %v360 = vadd.f32 %v292, %v344
    %v361 = vadd.f32 %v293, %v345
    %v362 = vadd.f32 %v294, %v346
    %v363 = vadd.f32 %v295, %v347
    %v364 = vadd.f32 %v296, %v348
    %v365 = vadd.f32 %v297, %v349
    %v366 = vadd.f32 %v298, %v350
    %v367 = vadd.f32 %v299, %v351
    %v368 = vadd.f32 %v300, %v352
    %v369 = vadd.f32 %v301, %v353
    %v370 = vadd.f32 %v302, %v354
    %v371 = vadd.f32 %v303, %v355
    %v372 = vadd.f32 %v304, %v356
    %v373 = vadd.f32 %v305, %v357
    %v374 = vlaneseq
    %v375 = vshrl.u32 %v374, 7
    %v376 = vsub.s32 5, %v375
    %v377 = vrot.slane %v16, %v376
    %vm378 = vcmp.eq.s32.totalorder %v18, %v377
    %vm379 = vcmp.eq.s32.totalorder %v19, %v377
    %vm380 = vcmp.eq.s32.totalorder %v20, %v377
    %vm381 = vcmp.eq.s32.totalorder %v21, %v377
    %vm382 = vcmp.eq.s32.totalorder %v22, %v377
    %vm383 = vcmp.eq.s32.totalorder %v23, %v377
    %vm384 = vcmp.eq.s32.totalorder %v24, %v377
    %vm385 = vcmp.eq.s32.totalorder %v25, %v377
    %vm386 = vcmp.eq.s32.totalorder %v26, %v377
    %vm387 = vcmp.eq.s32.totalorder %v27, %v377
    %vm388 = vcmp.eq.s32.totalorder %v28, %v377
    %vm389 = vcmp.eq.s32.totalorder %v29, %v377
    %vm390 = vcmp.eq.s32.totalorder %v30, %v377
    %vm391 = vcmp.eq.s32.totalorder %v31, %v377
    %vm392 = vcmp.eq.s32.totalorder %v32, %v377
    %vm393 = vcmp.eq.s32.totalorder %v33, %v377
    %v394 = vsel %vm378, 1, 0
    %v395 = vsel %vm379, 1, 0
    %v396 = vsel %vm380, 1, 0
    %v397 = vsel %vm381, 1, 0
    %v398 = vsel %vm382, 1, 0
    %v399 = vsel %vm383, 1, 0
    %v400 = vsel %vm384, 1, 0
    %v401 = vsel %vm385, 1, 0
    %v402 = vsel %vm386, 1, 0
    %v403 = vsel %vm387, 1, 0
    %v404 = vsel %vm388, 1, 0
    %v405 = vsel %vm389, 1, 0
    %v406 = vsel %vm390, 1, 0
    %v407 = vsel %vm391, 1, 0
    %v408 = vsel %vm392, 1, 0
    %v409 = vsel %vm393, 1, 0
    %v410 = vcvt.s32.f32 %v394
    %v411 = vcvt.s32.f32 %v395
    %v412 = vcvt.s32.f32 %v396
    %v413 = vcvt.s32.f32 %v397
    %v414 = vcvt.s32.f32 %v398
    %v415 = vcvt.s32.f32 %v399
    %v416 = vcvt.s32.f32 %v400
    %v417 = vcvt.s32.f32 %v401
    %v418 = vcvt.s32.f32 %v402
    %v419 = vcvt.s32.f32 %v403
    %v420 = vcvt.s32.f32 %v404
    %v421 = vcvt.s32.f32 %v405
    %v422 = vcvt.s32.f32 %v406
    %v423 = vcvt.s32.f32 %v407
    %v424 = vcvt.s32.f32 %v408
    %v425 = vcvt.s32.f32 %v409
    %v426 = vadd.f32 %v358, %v410
    %v427 = vadd.f32 %v359, %v411
    %v428 = vadd.f32 %v360, %v412
    %v429 = vadd.f32 %v361, %v413
    %v430 = vadd.f32 %v362, %v414
    %v431 = vadd.f32 %v363, %v415
    %v432 = vadd.f32 %v364, %v416
    %v433 = vadd.f32 %v365, %v417
    %v434 = vadd.f32 %v366, %v418
    %v435 = vadd.f32 %v367, %v419
    %v436 = vadd.f32 %v368, %v420
    %v437 = vadd.f32 %v369, %v421
    %v438 = vadd.f32 %v370, %v422
    %v439 = vadd.f32 %v371, %v423
    %v440 = vadd.f32 %v372, %v424
    %v441 = vadd.f32 %v373, %v425
    %v442 = vlaneseq
    %v443 = vshrl.u32 %v442, 7
    %v444 = vsub.s32 6, %v443
    %v445 = vrot.slane %v16, %v444
    %vm446 = vcmp.eq.s32.totalorder %v18, %v445
    %vm447 = vcmp.eq.s32.totalorder %v19, %v445
    %vm448 = vcmp.eq.s32.totalorder %v20, %v445
    %vm449 = vcmp.eq.s32.totalorder %v21, %v445
    %vm450 = vcmp.eq.s32.totalorder %v22, %v445
    %vm451 = vcmp.eq.s32.totalorder %v23, %v445
    %vm452 = vcmp.eq.s32.totalorder %v24, %v445
    %vm453 = vcmp.eq.s32.totalorder %v25, %v445
    %vm454 = vcmp.eq.s32.totalorder %v26, %v445
    %vm455 = vcmp.eq.s32.totalorder %v27, %v445
    %vm456 = vcmp.eq.s32.totalorder %v28, %v445
    %vm457 = vcmp.eq.s32.totalorder %v29, %v445
    %vm458 = vcmp.eq.s32.totalorder %v30, %v445
    %vm459 = vcmp.eq.s32.totalorder %v31, %v445
    %vm460 = vcmp.eq.s32.totalorder %v32, %v445
    %vm461 = vcmp.eq.s32.totalorder %v33, %v445
    %v462 = vsel %vm446, 1, 0
    %v463 = vsel %vm447, 1, 0
    %v464 = vsel %vm448, 1, 0
    %v465 = vsel %vm449, 1, 0
    %v466 = vsel %vm450, 1, 0
    %v467 = vsel %vm451, 1, 0
    %v468 = vsel %vm452, 1, 0
    %v469 = vsel %vm453, 1, 0
    %v470 = vsel %vm454, 1, 0
    %v471 = vsel %vm455, 1, 0
    %v472 = vsel %vm456, 1, 0
    %v473 = vsel %vm457, 1, 0
    %v474 = vsel %vm458, 1, 0
    %v475 = vsel %vm459, 1, 0
    %v476 = vsel %vm460, 1, 0
    %v477 = vsel %vm461, 1, 0
    %v478 = vcvt.s32.f32 %v462
    %v479 = vcvt.s32.f32 %v463
    %v480 = vcvt.s32.f32 %v464
    %v481 = vcvt.s32.f32 %v465
    %v482 = vcvt.s32.f32 %v466
    %v483 = vcvt.s32.f32 %v467
    %v484 = vcvt.s32.f32 %v468
    %v485 = vcvt.s32.f32 %v469
    %v486 = vcvt.s32.f32 %v470
    %v487 = vcvt.s32.f32 %v471
    %v488 = vcvt.s32.f32 %v472
    %v489 = vcvt.s32.f32 %v473
    %v490 = vcvt.s32.f32 %v474
    %v491 = vcvt.s32.f32 %v475
    %v492 = vcvt.s32.f32 %v476
    %v493 = vcvt.s32.f32 %v477
    %v494 = vadd.f32 %v426, %v478
    %v495 = vadd.f32 %v427, %v479
    %v496 = vadd.f32 %v428, %v480
    %v497 = vadd.f32 %v429, %v481
    %v498 = vadd.f32 %v430, %v482
    %v499 = vadd.f32 %v431, %v483
    %v500 = vadd.f32 %v432, %v484
    %v501 = vadd.f32 %v433, %v485
    %v502 = vadd.f32 %v434, %v486
    %v503 = vadd.f32 %v435, %v487
    %v504 = vadd.f32 %v436, %v488
    %v505 = vadd.f32 %v437, %v489
    %v506 = vadd.f32 %v438, %v490
    %v507 = vadd.f32 %v439, %v491
    %v508 = vadd.f32 %v440, %v492
    %v509 = vadd.f32 %v441, %v493
    %v510 = vlaneseq
    %v511 = vshrl.u32 %v510, 7
    %v512 = vsub.s32 7, %v511
    %v513 = vrot.slane %v16, %v512
    %vm514 = vcmp.eq.s32.totalorder %v18, %v513
    %vm515 = vcmp.eq.s32.totalorder %v19, %v513
    %vm516 = vcmp.eq.s32.totalorder %v20, %v513
    %vm517 = vcmp.eq.s32.totalorder %v21, %v513
    %vm518 = vcmp.eq.s32.totalorder %v22, %v513
    %vm519 = vcmp.eq.s32.totalorder %v23, %v513
    %vm520 = vcmp.eq.s32.totalorder %v24, %v513
    %vm521 = vcmp.eq.s32.totalorder %v25, %v513
    %vm522 = vcmp.eq.s32.totalorder %v26, %v513
    %vm523 = vcmp.eq.s32.totalorder %v27, %v513
    %vm524 = vcmp.eq.s32.totalorder %v28, %v513
    %vm525 = vcmp.eq.s32.totalorder %v29, %v513
    %vm526 = vcmp.eq.s32.totalorder %v30, %v513
    %vm527 = vcmp.eq.s32.totalorder %v31, %v513
    %vm528 = vcmp.eq.s32.totalorder %v32, %v513
    %vm529 = vcmp.eq.s32.totalorder %v33, %v513
    %v530 = vsel %vm514, 1, 0
    %v531 = vsel %vm515, 1, 0
    %v532 = vsel %vm516, 1, 0
    %v533 = vsel %vm517, 1, 0
    %v534 = vsel %vm518, 1, 0
    %v535 = vsel %vm519, 1, 0
    %v536 = vsel %vm520, 1, 0
    %v537 = vsel %vm521, 1, 0
    %v538 = vsel %vm522, 1, 0
    %v539 = vsel %vm523, 1, 0
    %v540 = vsel %vm524, 1, 0
    %v541 = vsel %vm525, 1, 0
    %v542 = vsel %vm526, 1, 0
    %v543 = vsel %vm527, 1, 0
    %v544 = vsel %vm528, 1, 0
    %v545 = vsel %vm529, 1, 0
    %v546 = vcvt.s32.f32 %v530
    %v547 = vcvt.s32.f32 %v531
    %v548 = vcvt.s32.f32 %v532
    %v549 = vcvt.s32.f32 %v533
    %v550 = vcvt.s32.f32 %v534
    %v551 = vcvt.s32.f32 %v535
    %v552 = vcvt.s32.f32 %v536
    %v553 = vcvt.s32.f32 %v537
    %v554 = vcvt.s32.f32 %v538
    %v555 = vcvt.s32.f32 %v539
    %v556 = vcvt.s32.f32 %v540
    %v557 = vcvt.s32.f32 %v541
    %v558 = vcvt.s32.f32 %v542
    %v559 = vcvt.s32.f32 %v543
    %v560 = vcvt.s32.f32 %v544
    %v561 = vcvt.s32.f32 %v545
    %v562 = vadd.f32 %v494, %v546
    %v563 = vadd.f32 %v495, %v547
    %v564 = vadd.f32 %v496, %v548
    %v565 = vadd.f32 %v497, %v549
    %v566 = vadd.f32 %v498, %v550
    %v567 = vadd.f32 %v499, %v551
    %v568 = vadd.f32 %v500, %v552
    %v569 = vadd.f32 %v501, %v553
    %v570 = vadd.f32 %v502, %v554
    %v571 = vadd.f32 %v503, %v555
    %v572 = vadd.f32 %v504, %v556
    %v573 = vadd.f32 %v505, %v557
    %v574 = vadd.f32 %v506, %v558
    %v575 = vadd.f32 %v507, %v559
    %v576 = vadd.f32 %v508, %v560
    %v577 = vadd.f32 %v509, %v561
    %v578 = vld [vmem:[%s1] sm:$0xff]
    %v579 = vld [vmem:[%s1 + $0x8] sm:$0xff]
    %v580 = vld [vmem:[%s1 + $0x10] sm:$0xff]
    %v581 = vld [vmem:[%s1 + $0x18] sm:$0xff]
    %v582 = vld [vmem:[%s1 + $0x20] sm:$0xff]
    %v583 = vld [vmem:[%s1 + $0x28] sm:$0xff]
    %v584 = vld [vmem:[%s1 + $0x30] sm:$0xff]
    %v585 = vld [vmem:[%s1 + $0x38] sm:$0xff]
    %v586 = vld [vmem:[%s1 + $0x40] sm:$0xff]
    %v587 = vld [vmem:[%s1 + $0x48] sm:$0xff]
    %v588 = vld [vmem:[%s1 + $0x50] sm:$0xff]
    %v589 = vld [vmem:[%s1 + $0x58] sm:$0xff]
    %v590 = vld [vmem:[%s1 + $0x60] sm:$0xff]
    %v591 = vld [vmem:[%s1 + $0x68] sm:$0xff]
    %v592 = vld [vmem:[%s1 + $0x70] sm:$0xff]
    %v593 = vld [vmem:[%s1 + $0x78] sm:$0xff]
    %595 = vset.pattern.permute.xlu0 0
    %596 = vperm.xlu0 %595, %v578
    %v597 = vpop.permute.xlu0 %596
    %600 = vset.pattern.permute.xlu0 0
    %601 = vperm.xlu0 %600, %v579
    %v602 = vpop.permute.xlu0 %601
    %605 = vset.pattern.permute.xlu0 0
    %606 = vperm.xlu0 %605, %v580
    %v607 = vpop.permute.xlu0 %606
    %610 = vset.pattern.permute.xlu0 0
    %611 = vperm.xlu0 %610, %v581
    %v612 = vpop.permute.xlu0 %611
    %615 = vset.pattern.permute.xlu0 0
    %616 = vperm.xlu0 %615, %v582
    %v617 = vpop.permute.xlu0 %616
    %620 = vset.pattern.permute.xlu0 0
    %621 = vperm.xlu0 %620, %v583
    %v622 = vpop.permute.xlu0 %621
    %625 = vset.pattern.permute.xlu0 0
    %626 = vperm.xlu0 %625, %v584
    %v627 = vpop.permute.xlu0 %626
    %630 = vset.pattern.permute.xlu0 0
    %631 = vperm.xlu0 %630, %v585
    %v632 = vpop.permute.xlu0 %631
    %635 = vset.pattern.permute.xlu0 0
    %636 = vperm.xlu0 %635, %v586
    %v637 = vpop.permute.xlu0 %636
    %640 = vset.pattern.permute.xlu0 0
    %641 = vperm.xlu0 %640, %v587
    %v642 = vpop.permute.xlu0 %641
    %645 = vset.pattern.permute.xlu0 0
    %646 = vperm.xlu0 %645, %v588
    %v647 = vpop.permute.xlu0 %646
    %650 = vset.pattern.permute.xlu0 0
    %651 = vperm.xlu0 %650, %v589
    %v652 = vpop.permute.xlu0 %651
    %655 = vset.pattern.permute.xlu0 0
    %656 = vperm.xlu0 %655, %v590
    %v657 = vpop.permute.xlu0 %656
    %660 = vset.pattern.permute.xlu0 0
    %661 = vperm.xlu0 %660, %v591
    %v662 = vpop.permute.xlu0 %661
    %665 = vset.pattern.permute.xlu0 0
    %666 = vperm.xlu0 %665, %v592
    %v667 = vpop.permute.xlu0 %666
    %670 = vset.pattern.permute.xlu0 0
    %671 = vperm.xlu0 %670, %v593
    %v672 = vpop.permute.xlu0 %671
    %v674 = vmul.f32 %v562, %v597
    %v675 = vmul.f32 %v563, %v602
    %v676 = vmul.f32 %v564, %v607
    %v677 = vmul.f32 %v565, %v612
    %v678 = vmul.f32 %v566, %v617
    %v679 = vmul.f32 %v567, %v622
    %v680 = vmul.f32 %v568, %v627
    %v681 = vmul.f32 %v569, %v632
    %v682 = vmul.f32 %v570, %v637
    %v683 = vmul.f32 %v571, %v642
    %v684 = vmul.f32 %v572, %v647
    %v685 = vmul.f32 %v573, %v652
    %v686 = vmul.f32 %v574, %v657
    %v687 = vmul.f32 %v575, %v662
    %v688 = vmul.f32 %v576, %v667
    %v689 = vmul.f32 %v577, %v672
    %v690 = vadd.f32 %v674, %v675
    %v691 = vadd.f32 %v690, %v676
    %v692 = vadd.f32 %v691, %v677
    %v693 = vadd.f32 %v692, %v678
    %v694 = vadd.f32 %v693, %v679
    %v695 = vadd.f32 %v694, %v680
    %v696 = vadd.f32 %v695, %v681
    %v697 = vadd.f32 %v696, %v682
    %v698 = vadd.f32 %v697, %v683
    %v699 = vadd.f32 %v698, %v684
    %v700 = vadd.f32 %v699, %v685
    %v701 = vadd.f32 %v700, %v686
    %v702 = vadd.f32 %v701, %v687
    %v703 = vadd.f32 %v702, %v688
    %v704 = vadd.f32 %v703, %v689
    %v705 = vrot.slane %v704, 4
    %v706 = vadd.f32 %v704, %v705
    %v707 = vrot.slane %v706, 2
    %v708 = vadd.f32 %v706, %v707
    %v709 = vrot.slane %v708, 1
    %v710 = vadd.f32 %v708, %v709
    %v711 = vmul.f32 %v710, 0.125
    %s712 = sld [smem:[#allocation2]]
    %v713 = vstv %s712
    %v714 = vadd.f32 %v711, %v713
    %v715 = vxor.u32 %v714, 2147483648
    %v716 = vmul.f32 %v715, 1.442695
    %v717 = vpow.pop %v716
    %v718 = vadd.f32 %v717, 1.0
    %v719 = vrcp.pop %v718
    %v720 = vmul.f32 1.0, %v719
    %721 = vst [vmem:[#allocation3] sm:$0x1] %v720
    // Predicated region
    $region14: #{tpu_custom_call.1} parent=1 // pred_check
      _
    $region15: #{tpu_custom_call.1} parent=1 // pred_check_branch
      %723 = sbr.rel (0) target = $region17
    $region16: #{tpu_custom_call.1} parent=1 // pred_region
      %s725 = ssub.s32 16, 16
      %726 = vsyncadd [#allocation4], %s725
      %s728 = sshll.u32 [#allocation3], 4
      %s729 = int_to_ptr.vmem [resolvable:$true] %s728
      %731 = dma.vmem_to_hbm [thread:$0]  %s729, 16, %s3, [#allocation4]
    $region17: #{tpu_custom_call.1} parent=1 // pred_fallthru
      _
    // Predicated region
    $region18: #{tpu_custom_call.1} parent=1 // pred_check
      _
    $region19: #{tpu_custom_call.1} parent=1 // pred_check_branch
      %733 = sbr.rel (0) target = $region21
    $region20: #{tpu_custom_call.1} parent=1 // pred_region
      %734 = dma.done [#allocation4], 16
    $region21: #{tpu_custom_call.1} parent=1 // pred_fallthru
      _
    %735 = vsyncpa [#allocation4], 1

</llo_original>
